<compile_context>
chip_gen: v6e
topology: v6e:2x2x1
jax: 0.10.0
libtpu: 0.0.40
codegen_flags: <defaults>
</compile_context>

<pallas_src>
import jax
import jax.numpy as jnp
from jax.experimental import pallas as pl
from jax.experimental.pallas import tpu as pltpu

NUM_INPUTS = 784    # 1 * 28 * 28
NUM_OUTPUTS = 10
N_PAD = 128         # lane-dense padded output width (multiple of 128)


def _round_up(x, m):
    return ((x + m - 1) // m) * m


def linear_kernel(x_ref, w_ref, b_ref, o_ref):
    # x_ref: (TB, K) bf16, w_ref: (K, N_PAD) bf16, b_ref: (1, N_PAD) f32,
    # o_ref: (TB, N_PAD) f32 -- lane-dense output, f32 MXU accumulation.
    acc = jnp.dot(x_ref[...], w_ref[...], preferred_element_type=jnp.float32)
    o_ref[...] = acc + b_ref[...]


def prepare_params(weight, bias):
    """One-time parameter packing (do NOT call per forward step):
    - transpose PyTorch (N, K) weight to (K, N) row-major for the MXU,
    - zero-pad N from 10 to 128 so the kernel output is lane-dense,
    - cast weight to bf16 (accumulation stays f32 in-kernel), bias stays f32.
    """
    K = weight.shape[1]
    w_packed = jnp.zeros((K, N_PAD), dtype=jnp.bfloat16)
    w_packed = w_packed.at[:, :NUM_OUTPUTS].set(weight.T.astype(jnp.bfloat16))
    b_packed = jnp.zeros((1, N_PAD), dtype=jnp.float32)
    b_packed = b_packed.at[:, :NUM_OUTPUTS].set(bias.astype(jnp.float32))
    return w_packed, b_packed


def linear_net_forward(x_nchw, w_packed, b_packed, *, batch_tile=512):
    """Forward pass of LinearNet: y = flatten(x) @ W^T + b.

    x_nchw   : (B, C, H, W) float32 with C*H*W == NUM_INPUTS
    w_packed : (NUM_INPUTS, N_PAD) bfloat16 from prepare_params
    b_packed : (1, N_PAD) float32 from prepare_params
    returns  : (B, NUM_OUTPUTS) float32
    """
    B = x_nchw.shape[0]
    x2d = x_nchw.reshape(B, -1).astype(jnp.bfloat16)   # == x.view(x.shape[0], -1)
    K = x2d.shape[1]

    # Batch tiling: large tiles amortize the ~0.35 us/step pipeline overhead;
    # tail batches are zero-padded and sliced off after the call.
    tb = min(batch_tile, _round_up(B, 8))
    b_pad = _round_up(B, tb)
    if b_pad != B:
        x2d = jnp.pad(x2d, ((0, b_pad - B), (0, 0)))
    grid = (b_pad // tb,)

    cost = pl.CostEstimate(
        flops=2 * b_pad * K * N_PAD,
        transcendentals=0,
        bytes_accessed=(b_pad * K * 2            # x (bf16) in
                        + K * N_PAD * 2          # W (bf16) in
                        + N_PAD * 4              # bias in
                        + b_pad * N_PAD * 4),    # out (f32)
    )

    out = pl.pallas_call(
        linear_kernel,
        out_shape=jax.ShapeDtypeStruct((b_pad, N_PAD), jnp.float32),
        grid_spec=pltpu.PrefetchScalarGridSpec(
            num_scalar_prefetch=0,
            grid=grid,
            in_specs=[
                pl.BlockSpec((tb, K), lambda i: (i, 0)),      # x: streamed per batch tile
                pl.BlockSpec((K, N_PAD), lambda i: (0, 0)),   # W: resident in VMEM
                pl.BlockSpec((1, N_PAD), lambda i: (0, 0)),   # b: resident in VMEM
            ],
            out_specs=pl.BlockSpec((tb, N_PAD), lambda i: (i, 0)),
        ),
        compiler_params=pltpu.CompilerParams(
            dimension_semantics=("parallel",),       # batch tiles are independent (2 TCs on v7x)
            vmem_limit_bytes=32 * 1024 * 1024,       # explicit cap; safe on v7x's 64 MiB VMEM
        ),
        cost_estimate=cost,
    )(x2d, w_packed, b_packed)

    # Slice off the batch padding and the lane padding (N_PAD -> 10).
    return out[:B, :NUM_OUTPUTS]


if __name__ == "__main__":
    key = jax.random.PRNGKey(0)
    kx, kw, kb = jax.random.split(key, 3)

    # Small deterministic example: batch=8, NCHW = (8, 1, 28, 28) -> 784 features.
    B = 8
    x = jax.random.normal(kx, (B, 1, 28, 28), dtype=jnp.float32)

    # nn.Linear default init: U(-1/sqrt(K), 1/sqrt(K))
    bound = 1.0 / (NUM_INPUTS ** 0.5)
    weight = jax.random.uniform(kw, (NUM_OUTPUTS, NUM_INPUTS),
                                dtype=jnp.float32, minval=-bound, maxval=bound)
    bias = jax.random.uniform(kb, (NUM_OUTPUTS,),
                              dtype=jnp.float32, minval=-bound, maxval=bound)

    # One-time parameter packing (transpose + pad + bf16 cast), then forward.
    w_packed, b_packed = prepare_params(weight, bias)
    y = linear_net_forward(x, w_packed, b_packed)
    y = jax.block_until_ready(y)

    # Sanity check against plain f32 JAX reference (bf16 inputs -> looser tol).
    y_ref = x.reshape(B, -1) @ weight.T + bias
    assert y.shape == (B, NUM_OUTPUTS)
    assert jnp.allclose(y, y_ref, atol=3e-2, rtol=2e-2)

    print("KERNEL_OK")
</pallas_src>

<mosaic_0001>
module attributes {stable_mosaic.version = 11 : i64} {
  func.func @linear_kernel(%arg0: i32, %arg1: memref<8x784xbf16, #tpu.memory_space<vmem>>, %arg2: memref<784x128xbf16, #tpu.memory_space<vmem>>, %arg3: memref<1x128xf32, #tpu.memory_space<vmem>>, %arg4: memref<8x128xf32, #tpu.memory_space<vmem>>) attributes {dimension_semantics = [#tpu.dimension_semantics<parallel>], iteration_bounds = array<i64: 1>, scalar_prefetch = 0 : i64, scratch_operands = 0 : i64, tpu.core_type = #tpu.core_type<tc>, window_params = [{transform_indices = @transform_0, window_bounds = array<i64: 8, 784>}, {pipeline_mode = #tpu.pipeline_mode<synchronous>, transform_indices = @transform_1, window_bounds = array<i64: 784, 128>}, {pipeline_mode = #tpu.pipeline_mode<synchronous>, transform_indices = @transform_2, window_bounds = array<i64: 1, 128>}, {transform_indices = @transform_3, window_bounds = array<i64: 8, 128>}]} {
    %c0 = arith.constant 0 : index
    %c0_0 = arith.constant 0 : index
    %0 = vector.load %arg1[%c0, %c0_0] : memref<8x784xbf16, #tpu.memory_space<vmem>>, vector<8x784xbf16>
    %c0_1 = arith.constant 0 : index
    %c0_2 = arith.constant 0 : index
    %1 = vector.load %arg2[%c0_1, %c0_2] : memref<784x128xbf16, #tpu.memory_space<vmem>>, vector<784x128xbf16>
    %cst = arith.constant dense<0.000000e+00> : vector<8x128xf32>
    %2 = tpu.matmul %0, %1, %cst {dimension_numbers = #tpu.dot_dimension_numbers<[1], [0], [0], [1], [0, 0, 1, 1], [], []>} : vector<8x784xbf16>, vector<784x128xbf16>, vector<8x128xf32> -> vector<8x128xf32>
    %c0_3 = arith.constant 0 : index
    %c0_4 = arith.constant 0 : index
    %3 = vector.load %arg3[%c0_3, %c0_4] : memref<1x128xf32, #tpu.memory_space<vmem>>, vector<1x128xf32>
    %4 = vector.broadcast %3 : vector<1x128xf32> to vector<8x128xf32>
    %5 = arith.addf %2, %4 : vector<8x128xf32>
    %c0_5 = arith.constant 0 : index
    %c0_6 = arith.constant 0 : index
    %6 = vector.load %arg4[%c0_5, %c0_6] : memref<8x128xf32, #tpu.memory_space<vmem>>, vector<8x128xf32>
    tpu.vector_store %arg4[%c0_5, %c0_6], %5 {strides = array<i32>} : memref<8x128xf32, #tpu.memory_space<vmem>>, vector<8x128xf32>,
    return
  }
  func.func @transform_0(%arg0: i32) -> (i32, i32) {
    %c0_i32 = arith.constant 0 : i32
    %c0_i32_0 = arith.constant 0 : i32
    return %arg0, %c0_i32 : i32, i32
  }
  func.func @transform_1(%arg0: i32) -> (i32, i32) {
    %c0_i32 = arith.constant 0 : i32
    %c0_i32_0 = arith.constant 0 : i32
    %c0_i32_1 = arith.constant 0 : i32
    return %c0_i32, %c0_i32_0 : i32, i32
  }
  func.func @transform_2(%arg0: i32) -> (i32, i32) {
    %c0_i32 = arith.constant 0 : i32
    %c0_i32_0 = arith.constant 0 : i32
    %c0_i32_1 = arith.constant 0 : i32
    return %c0_i32, %c0_i32_0 : i32, i32
  }
  func.func @transform_3(%arg0: i32) -> (i32, i32) {
    %c0_i32 = arith.constant 0 : i32
    %c0_i32_0 = arith.constant 0 : i32
    return %arg0, %c0_i32 : i32, i32
  }
}

</mosaic_0001>

<llo_original>
// kernel: tpu_custom_call.1
$region0: #{tpu_custom_call.1}
  #allocation0 [shape = 'u32[]', space=smem, size = 0x4, offset = 0x4, fixed_abs, tag = 'smem constant byte address 0x4 - core index']
  #allocation1 [shape = 'u32[144,128]{1,0:T(1,128)}', space=vmem, size = 0x12000, scoped, tag = 'internal scratch']
  %s0 = inlined_call_operand.hbm [shape: bf16[8,784], index: 0, kind: input, shape index: {}]
  %s1 = inlined_call_operand.hbm [shape: bf16[784,128], index: 1, kind: input, shape index: {}]
  %s2 = inlined_call_operand.vmem [shape: f32[1,128], index: 2, kind: input, shape index: {}]
  %s3 = inlined_call_operand.hbm [shape: f32[8,128], index: 3, kind: output, shape index: {}]
  %s4 = sld [smem:[#allocation0]]
  $region30: #{tpu_custom_call.1} parent=0
    _
  %s6 = ssub.s32 1, %s4
  %s7 = scalar_select 0, %s6, %s4
  $region1: #{tpu_custom_call.1} parent=0
    #allocation2 [shape = 'u8[14336]{0}', space=vmem, size = 0x3800, scoped, tag = 'input window, operand 0, single buffered']
    #allocation3 [shape = 's32[1]{0}', space=sflag, size = 0x4, scoped, tag = 'scoped memory for tpu_custom_call.1']
    #allocation4 [shape = 's32[1]{0}', space=sflag, size = 0x4, scoped, tag = 'scoped memory for tpu_custom_call.1']
    #allocation5 [shape = 'u8[200704]{0}', space=vmem, size = 0x31000, scoped, tag = 'input window, operand 1, single buffered']
    #allocation6 [shape = 's32[1]{0}', space=sflag, size = 0x4, scoped, tag = 'scoped memory for tpu_custom_call.1']
    #allocation7 [shape = 'u8[4096]{0}', space=vmem, size = 0x1000, scoped, tag = 'output window, operand 0, single buffered']
    %8 = vsyncpa [#allocation3], 0
    %9 = vsyncpa [#allocation6], 0
    %10 = vsyncpa [#allocation4], 0
    // Predicated region
    $region2: #{tpu_custom_call.1} parent=1 // pred_check
      _
    $region3: #{tpu_custom_call.1} parent=1 // pred_check_branch
      %12 = sbr.rel (0) target = $region5
    $region4: #{tpu_custom_call.1} parent=1 // pred_region
      %s14 = ssub.s32 448, 448
      %15 = vsyncadd [#allocation3], %s14
      %s17 = sshll.u32 [#allocation2], 4
      %s18 = int_to_ptr.vmem [resolvable:$true] %s17
      %20 = dma.hbm_to_vmem [thread:$0]  %s0, 448, %s18, [#allocation3]
    $region5: #{tpu_custom_call.1} parent=1 // pred_fallthru
      _
    // Predicated region
    $region6: #{tpu_custom_call.1} parent=1 // pred_check
      _
    $region7: #{tpu_custom_call.1} parent=1 // pred_check_branch
      %22 = sbr.rel (0) target = $region9
    $region8: #{tpu_custom_call.1} parent=1 // pred_region
      %s24 = ssub.s32 6272, 6272
      %25 = vsyncadd [#allocation6], %s24
      %s26 = sshll.u32 [#allocation5], 4
      %s27 = int_to_ptr.vmem [resolvable:$true] %s26
      %32 = dma.hbm_to_vmem [thread:$0]  %s1, 6272, %s27, [#allocation6], 64, 64, 4
    $region9: #{tpu_custom_call.1} parent=1 // pred_fallthru
      _
    // Predicated region
    $region10: #{tpu_custom_call.1} parent=1 // pred_check
      _
    $region11: #{tpu_custom_call.1} parent=1 // pred_check_branch
      %34 = sbr.rel (0) target = $region13
    $region12: #{tpu_custom_call.1} parent=1 // pred_region
      _
    $region13: #{tpu_custom_call.1} parent=1 // pred_fallthru
      _
    // Predicated region
    $region14: #{tpu_custom_call.1} parent=1 // pred_check
      _
    $region15: #{tpu_custom_call.1} parent=1 // pred_check_branch
      %36 = sbr.rel (0) target = $region17
    $region16: #{tpu_custom_call.1} parent=1 // pred_region
      %37 = dma.done [#allocation3], 448
    $region17: #{tpu_custom_call.1} parent=1 // pred_fallthru
      _
    // Predicated region
    $region18: #{tpu_custom_call.1} parent=1 // pred_check
      _
    $region19: #{tpu_custom_call.1} parent=1 // pred_check_branch
      %39 = sbr.rel (0) target = $region21
    $region20: #{tpu_custom_call.1} parent=1 // pred_region
      %40 = dma.done [#allocation6], 6272
    $region21: #{tpu_custom_call.1} parent=1 // pred_fallthru
      _
    %v42 = vld [vmem:[#allocation2] sm:$0xff]
    %v43 = vld [vmem:[#allocation2 + $0x8] sm:$0xff]
    %v44 = vld [vmem:[#allocation2 + $0x10] sm:$0xff]
    %v45 = vld [vmem:[#allocation2 + $0x18] sm:$0xf]
    %v46 = vld [vmem:[#allocation5] sm:$0xf]
    %v47 = vld [vmem:[#allocation5 + $0x4] sm:$0xf]
    %v48 = vld [vmem:[#allocation5 + $0x8] sm:$0xf]
    %v49 = vld [vmem:[#allocation5 + $0xc] sm:$0xf]
    %v50 = vld [vmem:[#allocation5 + $0x10] sm:$0xf]
    %v51 = vld [vmem:[#allocation5 + $0x14] sm:$0xf]
    %v52 = vld [vmem:[#allocation5 + $0x18] sm:$0xf]
    %v53 = vld [vmem:[#allocation5 + $0x1c] sm:$0xf]
    %v54 = vld [vmem:[#allocation5 + $0x20] sm:$0xf]
    %v55 = vld [vmem:[#allocation5 + $0x24] sm:$0xf]
    %v56 = vld [vmem:[#allocation5 + $0x28] sm:$0xf]
    %v57 = vld [vmem:[#allocation5 + $0x2c] sm:$0xf]
    %v58 = vld [vmem:[#allocation5 + $0x30] sm:$0xf]
    %v59 = vld [vmem:[#allocation5 + $0x34] sm:$0xf]
    %v60 = vld [vmem:[#allocation5 + $0x38] sm:$0xf]
    %v61 = vld [vmem:[#allocation5 + $0x3c] sm:$0xf]
    %v62 = vld [vmem:[#allocation5 + $0x40] sm:$0xf]
    %v63 = vld [vmem:[#allocation5 + $0x44] sm:$0xf]
    %v64 = vld [vmem:[#allocation5 + $0x48] sm:$0xf]
    %v65 = vld [vmem:[#allocation5 + $0x4c] sm:$0xf]
    %v66 = vld [vmem:[#allocation5 + $0x50] sm:$0xf]
    %v67 = vld [vmem:[#allocation5 + $0x54] sm:$0xf]
    %v68 = vld [vmem:[#allocation5 + $0x58] sm:$0xf]
    %v69 = vld [vmem:[#allocation5 + $0x5c] sm:$0xf]
    %v70 = vld [vmem:[#allocation5 + $0x60] sm:$0xf]
    %v71 = vld [vmem:[#allocation5 + $0x64] sm:$0xf]
    %v72 = vld [vmem:[#allocation5 + $0x68] sm:$0xf]
    %v73 = vld [vmem:[#allocation5 + $0x6c] sm:$0xf]
    %v74 = vld [vmem:[#allocation5 + $0x70] sm:$0xf]
    %v75 = vld [vmem:[#allocation5 + $0x74] sm:$0xf]
    %v76 = vld [vmem:[#allocation5 + $0x78] sm:$0xf]
    %v77 = vld [vmem:[#allocation5 + $0x7c] sm:$0xf]
    %v78 = vld [vmem:[#allocation5 + $0x80] sm:$0xf]
    %v79 = vld [vmem:[#allocation5 + $0x84] sm:$0xf]
    %v80 = vld [vmem:[#allocation5 + $0x88] sm:$0xf]
    %v81 = vld [vmem:[#allocation5 + $0x8c] sm:$0xf]
    %v82 = vld [vmem:[#allocation5 + $0x90] sm:$0xf]
    %v83 = vld [vmem:[#allocation5 + $0x94] sm:$0xf]
    %v84 = vld [vmem:[#allocation5 + $0x98] sm:$0xf]
    %v85 = vld [vmem:[#allocation5 + $0x9c] sm:$0xf]
    %v86 = vld [vmem:[#allocation5 + $0xa0] sm:$0xf]
    %v87 = vld [vmem:[#allocation5 + $0xa4] sm:$0xf]
    %v88 = vld [vmem:[#allocation5 + $0xa8] sm:$0xf]
    %v89 = vld [vmem:[#allocation5 + $0xac] sm:$0xf]
    %v90 = vld [vmem:[#allocation5 + $0xb0] sm:$0xf]
    %v91 = vld [vmem:[#allocation5 + $0xb4] sm:$0xf]
    %v92 = vld [vmem:[#allocation5 + $0xb8] sm:$0xf]
    %v93 = vld [vmem:[#allocation5 + $0xbc] sm:$0xf]
    %v94 = vld [vmem:[#allocation5 + $0xc0] sm:$0xf]
    %v95 = vld [vmem:[#allocation5 + $0xc4] sm:$0xf]
    %v96 = vld [vmem:[#allocation5 + $0xc8] sm:$0xf]
    %v97 = vld [vmem:[#allocation5 + $0xcc] sm:$0xf]
    %v98 = vld [vmem:[#allocation5 + $0xd0] sm:$0xf]
    %v99 = vld [vmem:[#allocation5 + $0xd4] sm:$0xf]
    %v100 = vld [vmem:[#allocation5 + $0xd8] sm:$0xf]
    %v101 = vld [vmem:[#allocation5 + $0xdc] sm:$0xf]
    %v102 = vld [vmem:[#allocation5 + $0xe0] sm:$0xf]
    %v103 = vld [vmem:[#allocation5 + $0xe4] sm:$0xf]
    %v104 = vld [vmem:[#allocation5 + $0xe8] sm:$0xf]
    %v105 = vld [vmem:[#allocation5 + $0xec] sm:$0xf]
    %v106 = vld [vmem:[#allocation5 + $0xf0] sm:$0xf]
    %v107 = vld [vmem:[#allocation5 + $0xf4] sm:$0xf]
    %v108 = vld [vmem:[#allocation5 + $0xf8] sm:$0xf]
    %v109 = vld [vmem:[#allocation5 + $0xfc] sm:$0xf]
    %v110 = vld [vmem:[#allocation5 + $0x100] sm:$0xf]
    %v111 = vld [vmem:[#allocation5 + $0x104] sm:$0xf]
    %v112 = vld [vmem:[#allocation5 + $0x108] sm:$0xf]
    %v113 = vld [vmem:[#allocation5 + $0x10c] sm:$0xf]
    %v114 = vld [vmem:[#allocation5 + $0x110] sm:$0xf]
    %v115 = vld [vmem:[#allocation5 + $0x114] sm:$0xf]
    %v116 = vld [vmem:[#allocation5 + $0x118] sm:$0xf]
    %v117 = vld [vmem:[#allocation5 + $0x11c] sm:$0xf]
    %v118 = vld [vmem:[#allocation5 + $0x120] sm:$0xf]
    %v119 = vld [vmem:[#allocation5 + $0x124] sm:$0xf]
    %v120 = vld [vmem:[#allocation5 + $0x128] sm:$0xf]
    %v121 = vld [vmem:[#allocation5 + $0x12c] sm:$0xf]
    %v122 = vld [vmem:[#allocation5 + $0x130] sm:$0xf]
    %v123 = vld [vmem:[#allocation5 + $0x134] sm:$0xf]
    %v124 = vld [vmem:[#allocation5 + $0x138] sm:$0xf]
    %v125 = vld [vmem:[#allocation5 + $0x13c] sm:$0xf]
    %v126 = vld [vmem:[#allocation5 + $0x140] sm:$0xf]
    %v127 = vld [vmem:[#allocation5 + $0x144] sm:$0xf]
    %v128 = vld [vmem:[#allocation5 + $0x148] sm:$0xf]
    %v129 = vld [vmem:[#allocation5 + $0x14c] sm:$0xf]
    %v130 = vld [vmem:[#allocation5 + $0x150] sm:$0xf]
    %v131 = vld [vmem:[#allocation5 + $0x154] sm:$0xf]
    %v132 = vld [vmem:[#allocation5 + $0x158] sm:$0xf]
    %v133 = vld [vmem:[#allocation5 + $0x15c] sm:$0xf]
    %v134 = vld [vmem:[#allocation5 + $0x160] sm:$0xf]
    %v135 = vld [vmem:[#allocation5 + $0x164] sm:$0xf]
    %v136 = vld [vmem:[#allocation5 + $0x168] sm:$0xf]
    %v137 = vld [vmem:[#allocation5 + $0x16c] sm:$0xf]
    %v138 = vld [vmem:[#allocation5 + $0x170] sm:$0xf]
    %v139 = vld [vmem:[#allocation5 + $0x174] sm:$0xf]
    %v140 = vld [vmem:[#allocation5 + $0x178] sm:$0xf]
    %v141 = vld [vmem:[#allocation5 + $0x17c] sm:$0xf]
    %v142 = vld [vmem:[#allocation5 + $0x180] sm:$0xf]
    %v143 = vld [vmem:[#allocation5 + $0x184] sm:$0xf]
    %v144 = vld [vmem:[%s2] sm:$0x1]
    %v146 = vlaneseq
    %v147 = vshrl.u32 %v146, 7
    %v148 = vsub.s32 0, %v147
    %v149 = vrot.slane %v144, %v148
    %v155 = vunpack.c.l.b16 %v42
    %v156 = vunpack.c.h.b16 %v42
    %v157 = vunpack.c.l.b16 %v43
    %v158 = vunpack.c.h.b16 %v43
    %v159 = vunpack.c.l.b16 %v44
    %v160 = vunpack.c.h.b16 %v44
    %v161 = vunpack.c.l.b16 %v45
    %v162 = vpack.c.b16 %v155, %v155
    %v163 = vpack.c.b16 %v156, %v156
    %v164 = vpack.c.b16 %v157, %v157
    %v165 = vpack.c.b16 %v158, %v158
    %v166 = vpack.c.b16 %v159, %v159
    %v167 = vpack.c.b16 %v160, %v160
    %v168 = vpack.c.b16 %v161, %v161
    %v273 = vunpack.c.l.b16 %v46
    %v274 = vunpack.c.l.b16 %v47
    %v275 = vunpack.c.l.b16 %v48
    %v276 = vunpack.c.l.b16 %v49
    %v277 = vunpack.c.l.b16 %v50
    %v278 = vunpack.c.l.b16 %v51
    %v279 = vunpack.c.l.b16 %v52
    %v280 = vunpack.c.l.b16 %v53
    %v281 = vunpack.c.l.b16 %v54
    %v282 = vunpack.c.l.b16 %v55
    %v283 = vunpack.c.l.b16 %v56
    %v284 = vunpack.c.l.b16 %v57
    %v285 = vunpack.c.l.b16 %v58
    %v286 = vunpack.c.l.b16 %v59
    %v287 = vunpack.c.l.b16 %v60
    %v288 = vunpack.c.l.b16 %v61
    %v289 = vunpack.c.l.b16 %v62
    %v290 = vunpack.c.l.b16 %v63
    %v291 = vunpack.c.l.b16 %v64
    %v292 = vunpack.c.l.b16 %v65
    %v293 = vunpack.c.l.b16 %v66
    %v294 = vunpack.c.l.b16 %v67
    %v295 = vunpack.c.l.b16 %v68
    %v296 = vunpack.c.l.b16 %v69
    %v297 = vunpack.c.l.b16 %v70
    %v298 = vunpack.c.l.b16 %v71
    %v299 = vunpack.c.l.b16 %v72
    %v300 = vunpack.c.l.b16 %v73
    %v301 = vunpack.c.l.b16 %v74
    %v302 = vunpack.c.l.b16 %v75
    %v303 = vunpack.c.l.b16 %v76
    %v304 = vunpack.c.l.b16 %v77
    %v305 = vunpack.c.l.b16 %v78
    %v306 = vunpack.c.l.b16 %v79
    %v307 = vunpack.c.l.b16 %v80
    %v308 = vunpack.c.l.b16 %v81
    %v309 = vunpack.c.l.b16 %v82
    %v310 = vunpack.c.l.b16 %v83
    %v311 = vunpack.c.l.b16 %v84
    %v312 = vunpack.c.l.b16 %v85
    %v313 = vunpack.c.l.b16 %v86
    %v314 = vunpack.c.l.b16 %v87
    %v315 = vunpack.c.l.b16 %v88
    %v316 = vunpack.c.l.b16 %v89
    %v317 = vunpack.c.l.b16 %v90
    %v318 = vunpack.c.l.b16 %v91
    %v319 = vunpack.c.l.b16 %v92
    %v320 = vunpack.c.l.b16 %v93
    %v321 = vunpack.c.l.b16 %v94
    %v322 = vunpack.c.l.b16 %v95
    %v323 = vunpack.c.l.b16 %v96
    %v324 = vunpack.c.l.b16 %v97
    %v325 = vunpack.c.l.b16 %v98
    %v326 = vunpack.c.l.b16 %v99
    %v327 = vunpack.c.l.b16 %v100
    %v328 = vunpack.c.l.b16 %v101
    %v329 = vunpack.c.l.b16 %v102
    %v330 = vunpack.c.l.b16 %v103
    %v331 = vunpack.c.l.b16 %v104
    %v332 = vunpack.c.l.b16 %v105
    %v333 = vunpack.c.l.b16 %v106
    %v334 = vunpack.c.l.b16 %v107
    %v335 = vunpack.c.l.b16 %v108
    %v336 = vunpack.c.l.b16 %v109
    %v337 = vunpack.c.l.b16 %v110
    %v338 = vunpack.c.l.b16 %v111
    %v339 = vunpack.c.l.b16 %v112
    %v340 = vunpack.c.l.b16 %v113
    %v341 = vunpack.c.l.b16 %v114
    %v342 = vunpack.c.l.b16 %v115
    %v343 = vunpack.c.l.b16 %v116
    %v344 = vunpack.c.l.b16 %v117
    %v345 = vunpack.c.l.b16 %v118
    %v346 = vunpack.c.l.b16 %v119
    %v347 = vunpack.c.l.b16 %v120
    %v348 = vunpack.c.l.b16 %v121
    %v349 = vunpack.c.l.b16 %v122
    %v350 = vunpack.c.l.b16 %v123
    %v351 = vunpack.c.l.b16 %v124
    %v352 = vunpack.c.l.b16 %v125
    %v353 = vunpack.c.l.b16 %v126
    %v354 = vunpack.c.l.b16 %v127
    %v355 = vunpack.c.l.b16 %v128
    %v356 = vunpack.c.l.b16 %v129
    %v357 = vunpack.c.l.b16 %v130
    %v358 = vunpack.c.l.b16 %v131
    %v359 = vunpack.c.l.b16 %v132
    %v360 = vunpack.c.l.b16 %v133
    %v361 = vunpack.c.l.b16 %v134
    %v362 = vunpack.c.l.b16 %v135
    %v363 = vunpack.c.l.b16 %v136
    %v364 = vunpack.c.l.b16 %v137
    %v365 = vunpack.c.l.b16 %v138
    %v366 = vunpack.c.l.b16 %v139
    %v367 = vunpack.c.l.b16 %v140
    %v368 = vunpack.c.l.b16 %v141
    %v369 = vunpack.c.l.b16 %v142
    %v370 = vunpack.c.l.b16 %v143
    %v371 = vpack.c.b16 %v274, %v273
    %v372 = vpack.c.b16 %v276, %v275
    %v373 = vpack.c.b16 %v278, %v277
    %v374 = vpack.c.b16 %v280, %v279
    %v375 = vpack.c.b16 %v282, %v281
    %v376 = vpack.c.b16 %v284, %v283
    %v377 = vpack.c.b16 %v286, %v285
    %v378 = vpack.c.b16 %v288, %v287
    %v379 = vpack.c.b16 %v290, %v289
    %v380 = vpack.c.b16 %v292, %v291
    %v381 = vpack.c.b16 %v294, %v293
    %v382 = vpack.c.b16 %v296, %v295
    %v383 = vpack.c.b16 %v298, %v297
    %v384 = vpack.c.b16 %v300, %v299
    %v385 = vpack.c.b16 %v302, %v301
    %v386 = vpack.c.b16 %v304, %v303
    %v387 = vpack.c.b16 %v306, %v305
    %v388 = vpack.c.b16 %v308, %v307
    %v389 = vpack.c.b16 %v310, %v309
    %v390 = vpack.c.b16 %v312, %v311
    %v391 = vpack.c.b16 %v314, %v313
    %v392 = vpack.c.b16 %v316, %v315
    %v393 = vpack.c.b16 %v318, %v317
    %v394 = vpack.c.b16 %v320, %v319
    %v395 = vpack.c.b16 %v322, %v321
    %v396 = vpack.c.b16 %v324, %v323
    %v397 = vpack.c.b16 %v326, %v325
    %v398 = vpack.c.b16 %v328, %v327
    %v399 = vpack.c.b16 %v330, %v329
    %v400 = vpack.c.b16 %v332, %v331
    %v401 = vpack.c.b16 %v334, %v333
    %v402 = vpack.c.b16 %v336, %v335
    %v403 = vpack.c.b16 %v338, %v337
    %v404 = vpack.c.b16 %v340, %v339
    %v405 = vpack.c.b16 %v342, %v341
    %v406 = vpack.c.b16 %v344, %v343
    %v407 = vpack.c.b16 %v346, %v345
    %v408 = vpack.c.b16 %v348, %v347
    %v409 = vpack.c.b16 %v350, %v349
    %v410 = vpack.c.b16 %v352, %v351
    %v411 = vpack.c.b16 %v354, %v353
    %v412 = vpack.c.b16 %v356, %v355
    %v413 = vpack.c.b16 %v358, %v357
    %v414 = vpack.c.b16 %v360, %v359
    %v415 = vpack.c.b16 %v362, %v361
    %v416 = vpack.c.b16 %v364, %v363
    %v417 = vpack.c.b16 %v366, %v365
    %v418 = vpack.c.b16 %v368, %v367
    %v419 = vpack.c.b16 %v370, %v369
    %vm469 = vcmask 130048
    %v471 = vsel %vm469, %v168, 0
    %473 = vmatprep.subr.bf16.mxu0 0
    %474 = vmatpush1.bf16.msra.mxu0 %v378
    %475 = vmatprep.subr.bf16.mxu0 0
    %476 = vmatpush1.bf16.msra.mxu0 %v377
    %477 = vmatprep.subr.bf16.mxu0 0
    %478 = vmatpush1.bf16.msra.mxu0 %v376
    %479 = vmatprep.subr.bf16.mxu0 0
    %480 = vmatpush1.bf16.msra.mxu0 %v375
    %481 = vmatprep.subr.bf16.mxu0 0
    %482 = vmatpush1.bf16.msra.mxu0 %v374
    %483 = vmatprep.subr.bf16.mxu0 0
    %484 = vmatpush1.bf16.msra.mxu0 %v373
    %485 = vmatprep.subr.bf16.mxu0 0
    %486 = vmatpush1.bf16.msra.mxu0 %v372
    %487 = vmatprep.subr.bf16.mxu0 0
    %488 = vmatpush1.bf16.msra.mxu0 %v371
    %489 = vmatprep.subr.bf16.mxu0 0
    %490 = vmatpush2.bf16.msra.mxu0 %v386
    %491 = vmatprep.subr.bf16.mxu0 0
    %492 = vmatpush2.bf16.msra.mxu0 %v385
    %493 = vmatprep.subr.bf16.mxu0 0
    %494 = vmatpush2.bf16.msra.mxu0 %v384
    %495 = vmatprep.subr.bf16.mxu0 0
    %496 = vmatpush2.bf16.msra.mxu0 %v383
    %497 = vmatprep.subr.bf16.mxu0 0
    %498 = vmatpush2.bf16.msra.mxu0 %v382
    %499 = vmatprep.subr.bf16.mxu0 0
    %500 = vmatpush2.bf16.msra.mxu0 %v381
    %501 = vmatprep.subr.bf16.mxu0 0
    %502 = vmatpush2.bf16.msra.mxu0 %v380
    %503 = vmatprep.subr.bf16.mxu0 0
    %504 = vmatpush2.bf16.msra.mxu0 %v379
    %505 = vmatprep.mubr.bf16.mxu0 %v163
    %506 = vmatmul.mubr.bf16.gmra.mxu0 %v162
    %v507 = vpop.f32.mrf.mxu0
    %v508 = vadd.f32 %v149, %v507
    %v509 = vpop.f32.mrf.mxu0
    %v510 = vpop.f32.mrf.mxu0
    %v511 = vpop.f32.mrf.mxu0
    %512 = vdwg.mxu0
    %513 = vmatprep.subr.bf16.mxu0 0
    %514 = vmatpush1.bf16.msra.mxu0 %v394
    %515 = vmatprep.subr.bf16.mxu0 0
    %516 = vmatpush1.bf16.msra.mxu0 %v393
    %517 = vmatprep.subr.bf16.mxu0 0
    %518 = vmatpush1.bf16.msra.mxu0 %v392
    %519 = vmatprep.subr.bf16.mxu0 0
    %520 = vmatpush1.bf16.msra.mxu0 %v391
    %521 = vmatprep.subr.bf16.mxu0 0
    %522 = vmatpush1.bf16.msra.mxu0 %v390
    %523 = vmatprep.subr.bf16.mxu0 0
    %524 = vmatpush1.bf16.msra.mxu0 %v389
    %525 = vmatprep.subr.bf16.mxu0 0
    %526 = vmatpush1.bf16.msra.mxu0 %v388
    %527 = vmatprep.subr.bf16.mxu0 0
    %528 = vmatpush1.bf16.msra.mxu0 %v387
    %529 = vmatprep.subr.bf16.mxu0 0
    %530 = vmatpush2.bf16.msra.mxu0 %v402
    %531 = vmatprep.subr.bf16.mxu0 0
    %532 = vmatpush2.bf16.msra.mxu0 %v401
    %533 = vmatprep.subr.bf16.mxu0 0
    %534 = vmatpush2.bf16.msra.mxu0 %v400
    %535 = vmatprep.subr.bf16.mxu0 0
    %536 = vmatpush2.bf16.msra.mxu0 %v399
    %537 = vmatprep.subr.bf16.mxu0 0
    %538 = vmatpush2.bf16.msra.mxu0 %v398
    %539 = vmatprep.subr.bf16.mxu0 0
    %540 = vmatpush2.bf16.msra.mxu0 %v397
    %541 = vmatprep.subr.bf16.mxu0 0
    %542 = vmatpush2.bf16.msra.mxu0 %v396
    %543 = vmatprep.subr.bf16.mxu0 0
    %544 = vmatpush2.bf16.msra.mxu0 %v395
    %545 = vmatprep.mubr.bf16.mxu0 %v165
    %546 = vmatmul.mubr.bf16.gmra.mxu0 %v164
    %v547 = vpop.f32.mrf.mxu0
    %v548 = vadd.f32 %v508, %v547
    %v549 = vpop.f32.mrf.mxu0
    %v550 = vpop.f32.mrf.mxu0
    %v551 = vpop.f32.mrf.mxu0
    %552 = vdwg.mxu0
    %553 = vmatprep.subr.bf16.mxu0 0
    %554 = vmatpush1.bf16.msra.mxu0 %v410
    %555 = vmatprep.subr.bf16.mxu0 0
    %556 = vmatpush1.bf16.msra.mxu0 %v409
    %557 = vmatprep.subr.bf16.mxu0 0
    %558 = vmatpush1.bf16.msra.mxu0 %v408
    %559 = vmatprep.subr.bf16.mxu0 0
    %560 = vmatpush1.bf16.msra.mxu0 %v407
    %561 = vmatprep.subr.bf16.mxu0 0
    %562 = vmatpush1.bf16.msra.mxu0 %v406
    %563 = vmatprep.subr.bf16.mxu0 0
    %564 = vmatpush1.bf16.msra.mxu0 %v405
    %565 = vmatprep.subr.bf16.mxu0 0
    %566 = vmatpush1.bf16.msra.mxu0 %v404
    %567 = vmatprep.subr.bf16.mxu0 0
    %568 = vmatpush1.bf16.msra.mxu0 %v403
    %569 = vmatprep.subr.bf16.mxu0 0
    %570 = vmatpush2.bf16.msra.mxu0 %v418
    %571 = vmatprep.subr.bf16.mxu0 0
    %572 = vmatpush2.bf16.msra.mxu0 %v417
    %573 = vmatprep.subr.bf16.mxu0 0
    %574 = vmatpush2.bf16.msra.mxu0 %v416
    %575 = vmatprep.subr.bf16.mxu0 0
    %576 = vmatpush2.bf16.msra.mxu0 %v415
    %577 = vmatprep.subr.bf16.mxu0 0
    %578 = vmatpush2.bf16.msra.mxu0 %v414
    %579 = vmatprep.subr.bf16.mxu0 0
    %580 = vmatpush2.bf16.msra.mxu0 %v413
    %581 = vmatprep.subr.bf16.mxu0 0
    %582 = vmatpush2.bf16.msra.mxu0 %v412
    %583 = vmatprep.subr.bf16.mxu0 0
    %584 = vmatpush2.bf16.msra.mxu0 %v411
    %585 = vmatprep.mubr.bf16.mxu0 %v167
    %586 = vmatmul.mubr.bf16.gmra.mxu0 %v166
    %v587 = vpop.f32.mrf.mxu0
    %v588 = vadd.f32 %v548, %v587
    %v589 = vpop.f32.mrf.mxu0
    %v590 = vpop.f32.mrf.mxu0
    %v591 = vpop.f32.mrf.mxu0
    %592 = vdwg.mxu0
    %593 = vmatprep.subr.bf16.mxu0 0
    %594 = vmatpush1.bf16.msra.mxu0 0
    %595 = vmatprep.subr.bf16.mxu0 0
    %596 = vmatpush1.bf16.msra.mxu0 0
    %597 = vmatprep.subr.bf16.mxu0 0
    %598 = vmatpush1.bf16.msra.mxu0 0
    %599 = vmatprep.subr.bf16.mxu0 0
    %600 = vmatpush1.bf16.msra.mxu0 0
    %601 = vmatprep.subr.bf16.mxu0 0
    %602 = vmatpush1.bf16.msra.mxu0 0
    %603 = vmatprep.subr.bf16.mxu0 0
    %604 = vmatpush1.bf16.msra.mxu0 0
    %605 = vmatprep.subr.bf16.mxu0 0
    %606 = vmatpush1.bf16.msra.mxu0 0
    %607 = vmatprep.subr.bf16.mxu0 0
    %608 = vmatpush1.bf16.msra.mxu0 %v419
    %609 = vmatprep.subr.bf16.mxu0 0
    %610 = vmatpush2.bf16.msra.mxu0 0
    %611 = vmatprep.subr.bf16.mxu0 0
    %612 = vmatpush2.bf16.msra.mxu0 0
    %613 = vmatprep.subr.bf16.mxu0 0
    %614 = vmatpush2.bf16.msra.mxu0 0
    %615 = vmatprep.subr.bf16.mxu0 0
    %616 = vmatpush2.bf16.msra.mxu0 0
    %617 = vmatprep.subr.bf16.mxu0 0
    %618 = vmatpush2.bf16.msra.mxu0 0
    %619 = vmatprep.subr.bf16.mxu0 0
    %620 = vmatpush2.bf16.msra.mxu0 0
    %621 = vmatprep.subr.bf16.mxu0 0
    %622 = vmatpush2.bf16.msra.mxu0 0
    %623 = vmatprep.subr.bf16.mxu0 0
    %624 = vmatpush2.bf16.msra.mxu0 0
    %625 = vmatprep.mubr.bf16.mxu0 0
    %626 = vmatmul.mubr.bf16.gmra.mxu0 %v471
    %v627 = vpop.f32.mrf.mxu0
    %v628 = vadd.f32 %v588, %v627
    %v629 = vpop.f32.mrf.mxu0
    %v630 = vpop.f32.mrf.mxu0
    %v631 = vpop.f32.mrf.mxu0
    %632 = vdwg.mxu0
    %633 = vst [vmem:[#allocation7] sm:$0xff] %v628
    // Predicated region
    $region22: #{tpu_custom_call.1} parent=1 // pred_check
      _
    $region23: #{tpu_custom_call.1} parent=1 // pred_check_branch
      %635 = sbr.rel (0) target = $region25
    $region24: #{tpu_custom_call.1} parent=1 // pred_region
      %s637 = ssub.s32 128, 128
      %638 = vsyncadd [#allocation4], %s637
      %s640 = sshll.u32 [#allocation7], 4
      %s641 = int_to_ptr.vmem [resolvable:$true] %s640
      %643 = dma.vmem_to_hbm [thread:$0]  %s641, 128, %s3, [#allocation4]
    $region25: #{tpu_custom_call.1} parent=1 // pred_fallthru
      _
    // Predicated region
    $region26: #{tpu_custom_call.1} parent=1 // pred_check
      _
    $region27: #{tpu_custom_call.1} parent=1 // pred_check_branch
      %645 = sbr.rel (0) target = $region29
    $region28: #{tpu_custom_call.1} parent=1 // pred_region
      %646 = dma.done [#allocation4], 128
    $region29: #{tpu_custom_call.1} parent=1 // pred_fallthru
      _
    %647 = vsyncpa [#allocation3], 1
    %648 = vsyncpa [#allocation6], 1
    %649 = vsyncpa [#allocation4], 1

</llo_original>
